<compile_context>
chip_gen: v7x
topology: tpu7x:2x2x1
jax: 0.10.0
libtpu: 0.0.40
codegen_flags: <defaults>
</compile_context>

<pallas_src>
import jax
import jax.numpy as jnp
from jax.experimental import pallas as pl
from jax.experimental.pallas import tpu as pltpu

DIM = 32              # feature size of the PyTorch module
LANES = 128           # TPU lane width
PACK = LANES // DIM   # 4 sequence rows packed per 128-lane row
HALF = DIM // 2       # 16


def _rope_linear_kernel(x_ref, tab_ref, w_ref, b_ref, o_ref):
    # x_ref:   (tile_r, 128) activations, natural packing (4 seq rows x 32 feats / row)
    # tab_ref: (tile_r, 128) combined RoPE table; per 32-lane block: [cos(16) | sin(16)]
    # w_ref:   (128, 128) block-diagonal kron(I4, W.T) (pre-transposed on host)
    # b_ref:   (1, 128)   bias tiled 4x
    x = x_ref[...].astype(jnp.float32)
    tab = tab_ref[...].astype(jnp.float32)

    lane = jax.lax.broadcasted_iota(jnp.int32, x.shape, 1)
    is_lo = (lane % DIM) < HALF                       # first half of each 32-feature block

    # pltpu.roll follows jnp.roll semantics: out[l] = in[(l - shift) % 128].
    tab_fwd = pltpu.roll(tab, shift=HALF, axis=1)           # out[l] = tab[l-16]
    tab_bwd = pltpu.roll(tab, shift=LANES - HALF, axis=1)    # out[l] = tab[l+16]
    cos_full = jnp.where(is_lo, tab, tab_fwd)                # [cos | cos] per 32-block
    sin_signed = jnp.where(is_lo, -tab_bwd, tab)             # [-sin | +sin] per 32-block

    x_fwd = pltpu.roll(x, shift=HALF, axis=1)                # out[l] = x[l-16]
    x_bwd = pltpu.roll(x, shift=LANES - HALF, axis=1)        # out[l] = x[l+16]
    rot = jnp.where(is_lo, x_bwd, x_fwd)                     # swap halves within each block

    x_rope = x * cos_full + rot * sin_signed

    # y = x_rope @ kron(I4, W.T): standard (tile,128)x(128,128) MXU contraction.
    y = jax.lax.dot_general(
        x_rope, w_ref[...],
        dimension_numbers=(((1,), (0,)), ((), ())),
        preferred_element_type=jnp.float32,
    )
    o_ref[...] = (y + b_ref[...] + x_rope).astype(o_ref.dtype)


def simple_layer(x, positions, weight, bias, *, block_rows=2048):
    """RoPE (split-half) -> Linear -> +residual, matching SimpleLayer.forward.

    x: (S, 32), positions: (S,), weight: (32, 32) torch (out, in), bias: (32,)
    """
    S, D = x.shape
    assert D == DIM and LANES % D == 0

    # ---- RoPE tables depend only on positions: compute once outside the kernel.
    theta = 10000.0 ** (-2.0 * (jnp.arange(HALF, dtype=jnp.float32) / D))
    angles = positions.astype(jnp.float32)[:, None] * theta[None, :]      # (S, 16)
    tab_seq = jnp.concatenate([jnp.cos(angles), jnp.sin(angles)], axis=-1)  # (S, 32)

    # ---- Tile-size selection: multiples of 8 rows, >=2 grid steps when possible.
    rows = pl.cdiv(S, PACK)
    rows8 = pl.cdiv(rows, 8) * 8
    tile_r = min(block_rows, rows8)
    if tile_r == rows8 and rows8 >= 16:
        tile_r = pl.cdiv(rows8 // 2, 8) * 8          # >=2 steps for v7x megacore
    rows_pad = pl.cdiv(rows8, tile_r) * tile_r
    s_pad = rows_pad * PACK
    pad = s_pad - S

    def pad_rows(a):
        return jnp.pad(a, ((0, pad), (0, 0))) if pad else a

    # ---- Natural contiguous packing: plain reshape, no transpose (no extra HBM pass).
    x_pk = pad_rows(x).reshape(rows_pad, LANES)
    tab_pk = pad_rows(tab_seq).reshape(rows_pad, LANES)

    # ---- Packed weight (pre-transposed, block diagonal) and bias: tiny, host-built.
    w_big = jnp.kron(jnp.eye(PACK, dtype=jnp.float32),
                     weight.T.astype(jnp.float32))            # (128, 128)
    b_big = jnp.tile(bias.astype(jnp.float32), PACK).reshape(1, LANES)

    grid = (rows_pad // tile_r,)
    out_pk = pl.pallas_call(
        _rope_linear_kernel,
        out_shape=jax.ShapeDtypeStruct((rows_pad, LANES), x.dtype),
        grid=grid,
        in_specs=[
            pl.BlockSpec((tile_r, LANES), lambda i: (i, 0)),   # x
            pl.BlockSpec((tile_r, LANES), lambda i: (i, 0)),   # combined cos/sin table
            pl.BlockSpec((LANES, LANES), lambda i: (0, 0)),    # packed weight (resident)
            pl.BlockSpec((1, LANES), lambda i: (0, 0)),        # packed bias (resident)
        ],
        out_specs=pl.BlockSpec((tile_r, LANES), lambda i: (i, 0)),
        compiler_params=pltpu.CompilerParams(
            dimension_semantics=("parallel",)),                # both TCs on v7x when grid>1
    )(x_pk, tab_pk, w_big, b_big)

    # ---- Unpack: plain reshape + slice off the padded tail.
    return out_pk.reshape(s_pad, D)[:S]


def _reference(x, positions, weight, bias):
    # Same split-half RoPE convention as the PyTorch module.
    D = x.shape[-1]
    D2 = D // 2
    theta = 10000.0 ** (-2.0 * (jnp.arange(D2, dtype=jnp.float32) / D))
    angles = positions[:, None] * theta[None, :]
    sin_a, cos_a = jnp.sin(angles), jnp.cos(angles)
    x1 = x[:, :D2] * cos_a - x[:, D2:] * sin_a
    x2 = x[:, :D2] * sin_a + x[:, D2:] * cos_a
    xr = jnp.concatenate([x1, x2], axis=-1)
    return xr @ weight.T + bias + xr


if __name__ == "__main__":
    seq = 8
    key = jax.random.PRNGKey(0)
    kx, kw, kb = jax.random.split(key, 3)

    x = jax.random.normal(kx, (seq, DIM), dtype=jnp.float32)
    positions = jnp.arange(seq, dtype=jnp.float32)

    # nn.Linear(dim, dim)-shaped parameters: weight (out, in), bias (out,)
    bound = 1.0 / jnp.sqrt(DIM)
    weight = jax.random.uniform(kw, (DIM, DIM), jnp.float32, -bound, bound)
    bias = jax.random.uniform(kb, (DIM,), jnp.float32, -bound, bound)

    out = simple_layer(x, positions, weight, bias)
    out = jax.block_until_ready(out)

    ref = _reference(x, positions, weight, bias)
    assert jnp.allclose(out, ref, atol=1e-4, rtol=1e-4), "mismatch vs reference"

    print("KERNEL_OK")
</pallas_src>

<mosaic_0001>
module attributes {stable_mosaic.version = 11 : i64} {
  func.func @_rope_linear_kernel(%arg0: i32, %arg1: memref<8x128xf32, #tpu.memory_space<vmem>>, %arg2: memref<8x128xf32, #tpu.memory_space<vmem>>, %arg3: memref<128x128xf32, #tpu.memory_space<vmem>>, %arg4: memref<1x128xf32, #tpu.memory_space<vmem>>, %arg5: memref<8x128xf32, #tpu.memory_space<vmem>>) attributes {dimension_semantics = [#tpu.dimension_semantics<parallel>], iteration_bounds = array<i64: 1>, scalar_prefetch = 0 : i64, scratch_operands = 0 : i64, tpu.core_type = #tpu.core_type<tc>, window_params = [{transform_indices = @transform_0, window_bounds = array<i64: 8, 128>}, {transform_indices = @transform_1, window_bounds = array<i64: 8, 128>}, {pipeline_mode = #tpu.pipeline_mode<synchronous>, transform_indices = @transform_2, window_bounds = array<i64: 128, 128>}, {pipeline_mode = #tpu.pipeline_mode<synchronous>, transform_indices = @transform_3, window_bounds = array<i64: 1, 128>}, {transform_indices = @transform_4, window_bounds = array<i64: 8, 128>}]} {
    %c0 = arith.constant 0 : index
    %c0_0 = arith.constant 0 : index
    %0 = vector.load %arg1[%c0, %c0_0] : memref<8x128xf32, #tpu.memory_space<vmem>>, vector<8x128xf32>
    %c0_1 = arith.constant 0 : index
    %c0_2 = arith.constant 0 : index
    %1 = vector.load %arg2[%c0_1, %c0_2] : memref<8x128xf32, #tpu.memory_space<vmem>>, vector<8x128xf32>
    %2 = tpu.iota {dimensions = array<i32: 1>} : vector<8x128xi32>
    %c32_i32 = arith.constant 32 : i32
    %c0_i32 = arith.constant 0 : i32
    %3 = arith.cmpi eq, %c32_i32, %c0_i32 : i32
    %c1_i32 = arith.constant 1 : i32
    %4 = arith.select %3, %c1_i32, %c32_i32 : i32
    %5 = vector.broadcast %4 : i32 to vector<8x128xi32>
    %6 = arith.remsi %2, %5 : vector<8x128xi32>
    %c0_i32_3 = arith.constant 0 : i32
    %7 = vector.broadcast %c0_i32_3 : i32 to vector<8x128xi32>
    %8 = arith.cmpi ne, %6, %7 : vector<8x128xi32>
    %c0_i32_4 = arith.constant 0 : i32
    %9 = vector.broadcast %c0_i32_4 : i32 to vector<8x128xi32>
    %10 = arith.cmpi slt, %6, %9 : vector<8x128xi32>
    %c0_i32_5 = arith.constant 0 : i32
    %11 = arith.cmpi slt, %4, %c0_i32_5 : i32
    %12 = vector.broadcast %11 : i1 to vector<8x128xi1>
    %13 = vector.broadcast %12 : vector<8x128xi1> to vector<8x128xi1>
    %14 = arith.xori %10, %13 : vector<8x128xi1>
    %15 = arith.andi %14, %8 : vector<8x128xi1>
    %16 = vector.broadcast %4 : i32 to vector<8x128xi32>
    %17 = arith.addi %6, %16 : vector<8x128xi32>
    %18 = arith.select %15, %17, %6 : vector<8x128xi1>, vector<8x128xi32>
    %c16_i32 = arith.constant 16 : i32
    %19 = vector.broadcast %c16_i32 : i32 to vector<8x128xi32>
    %20 = arith.cmpi slt, %18, %19 : vector<8x128xi32>
    %c16_i32_6 = arith.constant 16 : i32
    %21 = tpu.dynamic_rotate %1 by %c16_i32_6 dim 1 : vector<8x128xf32>, i32 -> vector<8x128xf32>
    %c112_i32 = arith.constant 112 : i32
    %22 = tpu.dynamic_rotate %1 by %c112_i32 dim 1 : vector<8x128xf32>, i32 -> vector<8x128xf32>
    %23 = arith.select %20, %1, %21 : vector<8x128xi1>, vector<8x128xf32>
    %cst = arith.constant 0.000000e+00 : f32
    %24 = vector.broadcast %cst : f32 to vector<8x128xf32>
    %25 = arith.subf %24, %22 : vector<8x128xf32>
    %26 = arith.select %20, %25, %1 : vector<8x128xi1>, vector<8x128xf32>
    %c16_i32_7 = arith.constant 16 : i32
    %27 = tpu.dynamic_rotate %0 by %c16_i32_7 dim 1 : vector<8x128xf32>, i32 -> vector<8x128xf32>
    %c112_i32_8 = arith.constant 112 : i32
    %28 = tpu.dynamic_rotate %0 by %c112_i32_8 dim 1 : vector<8x128xf32>, i32 -> vector<8x128xf32>
    %29 = arith.select %20, %28, %27 : vector<8x128xi1>, vector<8x128xf32>
    %30 = arith.mulf %0, %23 : vector<8x128xf32>
    %31 = arith.mulf %29, %26 : vector<8x128xf32>
    %32 = arith.addf %30, %31 : vector<8x128xf32>
    %c0_9 = arith.constant 0 : index
    %c0_10 = arith.constant 0 : index
    %33 = vector.load %arg3[%c0_9, %c0_10] : memref<128x128xf32, #tpu.memory_space<vmem>>, vector<128x128xf32>
    %cst_11 = arith.constant dense<0.000000e+00> : vector<8x128xf32>
    %34 = tpu.matmul %32, %33, %cst_11 {dimension_numbers = #tpu.dot_dimension_numbers<[1], [0], [0], [1], [0, 0, 1, 1], [], []>} : vector<8x128xf32>, vector<128x128xf32>, vector<8x128xf32> -> vector<8x128xf32>
    %c0_12 = arith.constant 0 : index
    %c0_13 = arith.constant 0 : index
    %35 = vector.load %arg4[%c0_12, %c0_13] : memref<1x128xf32, #tpu.memory_space<vmem>>, vector<1x128xf32>
    %36 = vector.broadcast %35 : vector<1x128xf32> to vector<8x128xf32>
    %37 = arith.addf %34, %36 : vector<8x128xf32>
    %38 = arith.addf %37, %32 : vector<8x128xf32>
    %c0_14 = arith.constant 0 : index
    %c0_15 = arith.constant 0 : index
    %39 = vector.load %arg5[%c0_14, %c0_15] : memref<8x128xf32, #tpu.memory_space<vmem>>, vector<8x128xf32>
    tpu.vector_store %arg5[%c0_14, %c0_15], %38 {strides = array<i32>} : memref<8x128xf32, #tpu.memory_space<vmem>>, vector<8x128xf32>,
    return
  }
  func.func @transform_0(%arg0: i32) -> (i32, i32) {
    %c0_i32 = arith.constant 0 : i32
    %c0_i32_0 = arith.constant 0 : i32
    return %arg0, %c0_i32 : i32, i32
  }
  func.func @transform_1(%arg0: i32) -> (i32, i32) {
    %c0_i32 = arith.constant 0 : i32
    %c0_i32_0 = arith.constant 0 : i32
    return %arg0, %c0_i32 : i32, i32
  }
  func.func @transform_2(%arg0: i32) -> (i32, i32) {
    %c0_i32 = arith.constant 0 : i32
    %c0_i32_0 = arith.constant 0 : i32
    %c0_i32_1 = arith.constant 0 : i32
    return %c0_i32, %c0_i32_0 : i32, i32
  }
  func.func @transform_3(%arg0: i32) -> (i32, i32) {
    %c0_i32 = arith.constant 0 : i32
    %c0_i32_0 = arith.constant 0 : i32
    %c0_i32_1 = arith.constant 0 : i32
    return %c0_i32, %c0_i32_0 : i32, i32
  }
  func.func @transform_4(%arg0: i32) -> (i32, i32) {
    %c0_i32 = arith.constant 0 : i32
    %c0_i32_0 = arith.constant 0 : i32
    return %arg0, %c0_i32 : i32, i32
  }
}

</mosaic_0001>

<llo_original>
// kernel: tpu_custom_call.1
$region0: #{tpu_custom_call.1}
  #allocation0 [shape = 'u32[]', space=smem, size = 0x4, offset = 0x4, fixed_abs, tag = 'smem constant byte address 0x4 - core index']
  #allocation1 [shape = 'u32[144,128]{1,0:T(1,128)}', space=vmem, size = 0x12000, scoped, tag = 'internal scratch']
  %s0 = inlined_call_operand.hbm [shape: f32[8,128], index: 0, kind: input, shape index: {}]
  %s1 = inlined_call_operand.hbm [shape: f32[8,128], index: 1, kind: input, shape index: {}]
  %s2 = inlined_call_operand.hbm [shape: f32[128,128], index: 2, kind: input, shape index: {}]
  %s3 = inlined_call_operand.vmem [shape: f32[1,128], index: 3, kind: input, shape index: {}]
  %s4 = inlined_call_operand.hbm [shape: f32[8,128], index: 4, kind: output, shape index: {}]
  %s5 = sld [smem:[#allocation0]]
  $region38: #{tpu_custom_call.1} parent=0
    _
  %s7 = ssub.s32 1, %s5
  %s8 = scalar_select 0, %s7, %s5
  $region1: #{tpu_custom_call.1} parent=0
    #allocation2 [shape = 'u8[4096]{0}', space=vmem, size = 0x1000, scoped, tag = 'input window, operand 0, single buffered']
    #allocation3 [shape = 's32[1]{0}', space=sflag, size = 0x4, scoped, tag = 'scoped memory for tpu_custom_call.1']
    #allocation4 [shape = 's32[1]{0}', space=sflag, size = 0x4, scoped, tag = 'scoped memory for tpu_custom_call.1']
    #allocation5 [shape = 'u8[4096]{0}', space=vmem, size = 0x1000, scoped, tag = 'input window, operand 1, single buffered']
    #allocation6 [shape = 's32[1]{0}', space=sflag, size = 0x4, scoped, tag = 'scoped memory for tpu_custom_call.1']
    #allocation7 [shape = 'u8[65536]{0}', space=vmem, size = 0x10000, scoped, tag = 'input window, operand 2, single buffered']
    #allocation8 [shape = 'u8[4096]{0}', space=vmem, size = 0x1000, scoped, tag = 'output window, operand 0, single buffered']
    %9 = vsyncpa [#allocation3], 0
    %10 = vsyncpa [#allocation6], 0
    %11 = vsyncpa [#allocation4], 0
    // Predicated region
    $region2: #{tpu_custom_call.1} parent=1 // pred_check
      _
    $region3: #{tpu_custom_call.1} parent=1 // pred_check_branch
      %13 = sbr.rel (0) target = $region5
    $region4: #{tpu_custom_call.1} parent=1 // pred_region
      %s15 = ssub.s32 128, 128
      %16 = vsyncadd [#allocation3], %s15
      %s18 = sshll.u32 [#allocation2], 4
      %s19 = int_to_ptr.vmem [resolvable:$true] %s18
      %21 = dma.hbm_to_vmem [thread:$0]  %s0, 128, %s19, [#allocation3]
    $region5: #{tpu_custom_call.1} parent=1 // pred_fallthru
      _
    // Predicated region
    $region6: #{tpu_custom_call.1} parent=1 // pred_check
      _
    $region7: #{tpu_custom_call.1} parent=1 // pred_check_branch
      %23 = sbr.rel (0) target = $region9
    $region8: #{tpu_custom_call.1} parent=1 // pred_region
      %s25 = ssub.s32 128, 128
      %26 = vsyncadd [#allocation6], %s25
      %s28 = sshll.u32 [#allocation5], 4
      %s29 = int_to_ptr.vmem [resolvable:$true] %s28
      %31 = dma.hbm_to_vmem [thread:$0]  %s1, 128, %s29, [#allocation6]
    $region9: #{tpu_custom_call.1} parent=1 // pred_fallthru
      _
    // Predicated region
    $region10: #{tpu_custom_call.1} parent=1 // pred_check
      _
    $region11: #{tpu_custom_call.1} parent=1 // pred_check_branch
      %33 = sbr.rel (0) target = $region13
    $region12: #{tpu_custom_call.1} parent=1 // pred_region
      %s35 = ssub.s32 2048, 2048
      %36 = vsyncadd [#allocation6], %s35
      %s37 = sshll.u32 [#allocation7], 4
      %s38 = int_to_ptr.vmem [resolvable:$true] %s37
      %43 = dma.hbm_to_vmem [thread:$0]  %s2, 2048, %s38, [#allocation6], 128, 128, 8
    $region13: #{tpu_custom_call.1} parent=1 // pred_fallthru
      _
    // Predicated region
    $region14: #{tpu_custom_call.1} parent=1 // pred_check
      _
    $region15: #{tpu_custom_call.1} parent=1 // pred_check_branch
      %45 = sbr.rel (0) target = $region17
    $region16: #{tpu_custom_call.1} parent=1 // pred_region
      _
    $region17: #{tpu_custom_call.1} parent=1 // pred_fallthru
      _
    // Predicated region
    $region18: #{tpu_custom_call.1} parent=1 // pred_check
      _
    $region19: #{tpu_custom_call.1} parent=1 // pred_check_branch
      %47 = sbr.rel (0) target = $region21
    $region20: #{tpu_custom_call.1} parent=1 // pred_region
      %48 = dma.done [#allocation3], 128
    $region21: #{tpu_custom_call.1} parent=1 // pred_fallthru
      _
    // Predicated region
    $region22: #{tpu_custom_call.1} parent=1 // pred_check
      _
    $region23: #{tpu_custom_call.1} parent=1 // pred_check_branch
      %50 = sbr.rel (0) target = $region25
    $region24: #{tpu_custom_call.1} parent=1 // pred_region
      %51 = dma.done [#allocation6], 128
    $region25: #{tpu_custom_call.1} parent=1 // pred_fallthru
      _
    // Predicated region
    $region26: #{tpu_custom_call.1} parent=1 // pred_check
      _
    $region27: #{tpu_custom_call.1} parent=1 // pred_check_branch
      %53 = sbr.rel (0) target = $region29
    $region28: #{tpu_custom_call.1} parent=1 // pred_region
      %54 = dma.done [#allocation6], 2048
    $region29: #{tpu_custom_call.1} parent=1 // pred_fallthru
      _
    %v55 = vld [vmem:[#allocation2] sm:$0xff]
    %v56 = vld [vmem:[#allocation5] sm:$0xff]
    %v57 = vlaneseq
    %v58 = vand.u32 %v57, 127
    %vm59 = vcmp.lt.s32.totalorder %v58, 0
    %v60 = vsub.s32 0, %v58
    %v61 = vsel %vm59, %v60, %v58
    %v62 = vshrl.u32 %v61, 5
    %v63 = vand.u32 %v61, 31
    %v64 = vsub.s32 0, %v63
    %v65 = vsel %vm59, %v64, %v63
    %vm66 = vcmp.ne.s32.totalorder %v65, 0
    %vm67 = vcmp.lt.s32.totalorder %v65, 0
    %vm68 = vmand %vm67, %vm66
    %v69 = vadd.s32 %v65, 32
    %v70 = vsel %vm68, %v69, %v65
    %vm71 = vcmp.lt.s32.totalorder %v70, 16
    %72 = vrot.lane.b32.xlu0 %v56, 16
    %v73 = vpop.permute.xlu0 %72
    %74 = vrot.lane.b32.xlu0 %v56, 112
    %v75 = vpop.permute.xlu0 %74
    %v76 = vsel %vm71, %v56, %v73
    %v77 = vsub.f32 0.0, %v75
    %v78 = vsel %vm71, %v77, %v56
    %79 = vrot.lane.b32.xlu0 %v55, 16
    %v80 = vpop.permute.xlu0 %79
    %81 = vrot.lane.b32.xlu0 %v55, 112
    %v82 = vpop.permute.xlu0 %81
    %v83 = vsel %vm71, %v82, %v80
    %v84 = vmul.f32 %v55, %v76
    %v85 = vmul.f32 %v83, %v78
    %v86 = vadd.f32 %v84, %v85
    %v87 = vld [vmem:[#allocation7] sm:$0xff]
    %v88 = vld [vmem:[#allocation7 + $0x8] sm:$0xff]
    %v89 = vld [vmem:[#allocation7 + $0x10] sm:$0xff]
    %v90 = vld [vmem:[#allocation7 + $0x18] sm:$0xff]
    %v91 = vld [vmem:[#allocation7 + $0x20] sm:$0xff]
    %v92 = vld [vmem:[#allocation7 + $0x28] sm:$0xff]
    %v93 = vld [vmem:[#allocation7 + $0x30] sm:$0xff]
    %v94 = vld [vmem:[#allocation7 + $0x38] sm:$0xff]
    %v95 = vld [vmem:[#allocation7 + $0x40] sm:$0xff]
    %v96 = vld [vmem:[#allocation7 + $0x48] sm:$0xff]
    %v97 = vld [vmem:[#allocation7 + $0x50] sm:$0xff]
    %v98 = vld [vmem:[#allocation7 + $0x58] sm:$0xff]
    %v99 = vld [vmem:[#allocation7 + $0x60] sm:$0xff]
    %v100 = vld [vmem:[#allocation7 + $0x68] sm:$0xff]
    %v101 = vld [vmem:[#allocation7 + $0x70] sm:$0xff]
    %v102 = vld [vmem:[#allocation7 + $0x78] sm:$0xff]
    %v103 = vld [vmem:[%s3] sm:$0x1]
    %v105 = vlaneseq
    %v106 = vshrl.u32 %v105, 7
    %v107 = vsub.s32 0, %v106
    %v108 = vrot.slane %v103, %v107
    %110 = vmatprep.subr.mxu0 0.0
    %111 = vmatpush1.msra.mxu0 %v87
    %112 = vmatprep.subr.mxu0 0.0
    %113 = vmatpush1.msra.mxu0 %v88
    %114 = vmatprep.subr.mxu0 0.0
    %115 = vmatpush1.msra.mxu0 %v89
    %116 = vmatprep.subr.mxu0 0.0
    %117 = vmatpush1.msra.mxu0 %v90
    %118 = vmatprep.subr.mxu0 0.0
    %119 = vmatpush1.msra.mxu0 %v91
    %120 = vmatprep.subr.mxu0 0.0
    %121 = vmatpush1.msra.mxu0 %v92
    %122 = vmatprep.subr.mxu0 0.0
    %123 = vmatpush1.msra.mxu0 %v93
    %124 = vmatprep.subr.mxu0 0.0
    %125 = vmatpush1.msra.mxu0 %v94
    %126 = vmatprep.subr.mxu0 0.0
    %127 = vmatpush1.msra.mxu0 %v95
    %128 = vmatprep.subr.mxu0 0.0
    %129 = vmatpush1.msra.mxu0 %v96
    %130 = vmatprep.subr.mxu0 0.0
    %131 = vmatpush1.msra.mxu0 %v97
    %132 = vmatprep.subr.mxu0 0.0
    %133 = vmatpush1.msra.mxu0 %v98
    %134 = vmatprep.subr.mxu0 0.0
    %135 = vmatpush1.msra.mxu0 %v99
    %136 = vmatprep.subr.mxu0 0.0
    %137 = vmatpush1.msra.mxu0 %v100
    %138 = vmatprep.subr.mxu0 0.0
    %139 = vmatpush1.msra.mxu0 %v101
    %140 = vmatprep.subr.mxu0 0.0
    %141 = vmatpush1.msra.mxu0 %v102
    %142 = vmatprep.subr.mxu0 0.0
    %143 = vmatpush1.msra.mxu0 0.0
    %144 = vmatprep.subr.mxu0 0.0
    %145 = vmatpush1.msra.mxu0 0.0
    %146 = vmatprep.subr.mxu0 0.0
    %147 = vmatpush1.msra.mxu0 0.0
    %148 = vmatprep.subr.mxu0 0.0
    %149 = vmatpush1.msra.mxu0 0.0
    %150 = vmatprep.subr.mxu0 0.0
    %151 = vmatpush1.msra.mxu0 0.0
    %152 = vmatprep.subr.mxu0 0.0
    %153 = vmatpush1.msra.mxu0 0.0
    %154 = vmatprep.subr.mxu0 0.0
    %155 = vmatpush1.msra.mxu0 0.0
    %156 = vmatprep.subr.mxu0 0.0
    %157 = vmatpush1.msra.mxu0 0.0
    %158 = vmatprep.subr.mxu0 0.0
    %159 = vmatpush1.msra.mxu0 0.0
    %160 = vmatprep.subr.mxu0 0.0
    %161 = vmatpush1.msra.mxu0 0.0
    %162 = vmatprep.subr.mxu0 0.0
    %163 = vmatpush1.msra.mxu0 0.0
    %164 = vmatprep.subr.mxu0 0.0
    %165 = vmatpush1.msra.mxu0 0.0
    %166 = vmatprep.subr.mxu0 0.0
    %167 = vmatpush1.msra.mxu0 0.0
    %168 = vmatprep.subr.mxu0 0.0
    %169 = vmatpush1.msra.mxu0 0.0
    %170 = vmatprep.subr.mxu0 0.0
    %171 = vmatpush1.msra.mxu0 0.0
    %172 = vmatprep.subr.mxu0 0.0
    %173 = vmatpush1.msra.mxu0 0.0
    %174 = vmatprep.mubr.f32.mxu0 0.0
    %175 = vmatmul.mubr.f32.gmra.mrb[0].mxu0 %v86
    %v176 = vpop.f32.mrb[0].mxu0
    %v177 = vadd.f32 %v108, %v176
    %v178 = vpop.f32.mrb[0].mxu0
    %179 = vdwg.mxu0
    %v180 = vadd.f32 %v177, %v86
    %181 = vst [vmem:[#allocation8] sm:$0xff] %v180
    // Predicated region
    $region30: #{tpu_custom_call.1} parent=1 // pred_check
      _
    $region31: #{tpu_custom_call.1} parent=1 // pred_check_branch
      %183 = sbr.rel (0) target = $region33
    $region32: #{tpu_custom_call.1} parent=1 // pred_region
      %s185 = ssub.s32 128, 128
      %186 = vsyncadd [#allocation4], %s185
      %s188 = sshll.u32 [#allocation8], 4
      %s189 = int_to_ptr.vmem [resolvable:$true] %s188
      %191 = dma.vmem_to_hbm [thread:$0]  %s189, 128, %s4, [#allocation4]
    $region33: #{tpu_custom_call.1} parent=1 // pred_fallthru
      _
    // Predicated region
    $region34: #{tpu_custom_call.1} parent=1 // pred_check
      _
    $region35: #{tpu_custom_call.1} parent=1 // pred_check_branch
      %193 = sbr.rel (0) target = $region37
    $region36: #{tpu_custom_call.1} parent=1 // pred_region
      %194 = dma.done [#allocation4], 128
    $region37: #{tpu_custom_call.1} parent=1 // pred_fallthru
      _
    %195 = vsyncpa [#allocation3], 1
    %196 = vsyncpa [#allocation6], 1
    %197 = vsyncpa [#allocation4], 1

</llo_original>
